<compile_context>
chip_gen: v6e
topology: v6e:2x2x1
jax: 0.10.0
libtpu: 0.0.40
codegen_flags: <defaults>
</compile_context>

<pallas_src>
import functools

import jax
import jax.numpy as jnp
from jax.experimental import pallas as pl
from jax.experimental.pallas import tpu as pltpu

BN_EPS = 1e-5
L2_EPS = 1e-12

_MODES = {
    'before_bn':      (True,  True,  False),
    'after_bn':       (False, True,  True),
    'wo_bn':          (True,  False, False),
    'wo_bn_wo_norm':  (False, False, False),
    'wo_norm_wo_bn':  (False, False, False),
}

_TC_CANDIDATES = (2048, 1024, 512, 256, 128)


def _l2_normalize_rows(v):
    # F.normalize(v, dim=-1): v / max(||v||, 1e-12); rsqrt goes to the EUP.
    ss = jnp.sum(v * v, axis=-1, keepdims=True)
    return v * jax.lax.rsqrt(jnp.maximum(ss, L2_EPS * L2_EPS))


# --------------------- generation-aware tiling / VMEM budgets ---------------------

def _device_kind():
    try:
        return jax.devices()[0].device_kind.lower()
    except Exception:
        return ""


def _gen_budgets():
    """(per-step block-byte budget, scoped-VMEM cap)."""
    if "v7" in _device_kind():
        return 24 << 20, 48 << 20      # v7x: 64 MiB VMEM per TensorCore
    return 80 << 20, 100 << 20         # v5e / v6e: 128 MiB VMEM


def _stage2_bytes(n, d, tc):
    z_b = n * d * 2                    # resident bf16 activation
    w_b = 2 * d * tc * 2               # double-buffered bf16 weight tile
    o_b = 2 * n * tc * 4               # double-buffered f32 output tile
    return z_b + w_b + o_b


def choose_class_tile(n, d, class_num):
    """Largest class-tile (multiple of 128) that fits the per-generation budget
    without exceeding the 128-padded class count."""
    block_budget, _ = _gen_budgets()
    c128 = ((class_num + 127) // 128) * 128
    for cand in _TC_CANDIDATES:
        if cand <= c128 and _stage2_bytes(n, d, cand) <= block_budget:
            return cand
    return 128


def prepare_classifier_weight(weight, tc=128, pad_even_tiles=None):
    """One-time weight prep (re-run whenever W changes, e.g. each training step):
       * L2-normalize each class row in f32 (this IS NormLinear's weight normalize),
       * pad the class axis to a multiple of `tc` (zero rows -> exactly-zero logits),
       * on v7x, pad the tile count to an even number so both TensorCores get work,
       * transpose to (D, C_pad) for the canonical (M,K)x(K,N) MXU feed,
       * cast to bf16 (halves the dominant HBM stream)."""
    c, d = weight.shape
    w = _l2_normalize_rows(weight.astype(jnp.float32))          # f32 normalize, once
    n_tiles = -(-c // tc)
    if pad_even_tiles is None:
        pad_even_tiles = "v7" in _device_kind()
    if pad_even_tiles and n_tiles > 1 and (n_tiles % 2):
        n_tiles += 1
    c_pad = n_tiles * tc
    w = jnp.pad(w, ((0, c_pad - c), (0, 0)))
    return jnp.transpose(w).astype(jnp.bfloat16)                # (D, C_pad) bf16


# ------------------------------- stage 1: prepass ---------------------------------

def _prepass_kernel(x_ref, gamma_ref, beta_ref, z_ref, *, pre_norm, use_bn, post_norm):
    # One-shot over the full batch (training-mode BN needs all of N).
    z = x_ref[...].astype(jnp.float32)
    if pre_norm:                                    # F.normalize(x) before BN
        z = _l2_normalize_rows(z)
    if use_bn:
        # Training-mode BatchNorm1d, two-pass variance in f32 (numerically safe
        # for 'after_bn' where z can have a large mean), folded scale/shift.
        n = z.shape[0]
        inv_n = 1.0 / n
        mean = jnp.sum(z, axis=0, keepdims=True) * inv_n            # (1, D)
        centered = z - mean
        var = jnp.sum(centered * centered, axis=0, keepdims=True) * inv_n
        scale = gamma_ref[...] * jax.lax.rsqrt(var + BN_EPS)        # (1, D)
        z = centered * scale + beta_ref[...]
    if post_norm:                                   # F.normalize(BN(x))
        z = _l2_normalize_rows(z)
    z_ref[...] = z.astype(z_ref.dtype)              # bf16 residency for stage 2


def _bn_norm_prepass(x, gamma, beta, pre_norm, use_bn, post_norm):
    n, d = x.shape
    gamma2 = gamma.reshape(1, d).astype(jnp.float32)
    beta2 = beta.reshape(1, d).astype(jnp.float32)
    kernel = functools.partial(_prepass_kernel, pre_norm=pre_norm,
                               use_bn=use_bn, post_norm=post_norm)
    return pl.pallas_call(
        kernel,
        out_shape=jax.ShapeDtypeStruct((n, d), jnp.bfloat16),
        grid_spec=pltpu.PrefetchScalarGridSpec(
            num_scalar_prefetch=0,
            grid=(1,),
            in_specs=[
                pl.BlockSpec((n, d), lambda i: (0, 0)),   # full batch (BN stats)
                pl.BlockSpec((1, d), lambda i: (0, 0)),
                pl.BlockSpec((1, d), lambda i: (0, 0)),
            ],
            out_specs=pl.BlockSpec((n, d), lambda i: (0, 0)),
        ),
        compiler_params=pltpu.CompilerParams(
            dimension_semantics=("arbitrary",)),
    )(x.astype(jnp.float32), gamma2, beta2)


# ------------------------------ stage 2: classifier -------------------------------

def _logits_kernel(z_ref, w_ref, out_ref):
    # Pure DMA + MXU streamer: bf16 inputs, canonical (M,K)x(K,N), f32 accumulation,
    # lane-dense (N, tc) stores.  No per-tile normalize / transpose / stats.
    out_ref[...] = jnp.dot(z_ref[...], w_ref[...],
                           preferred_element_type=jnp.float32).astype(out_ref.dtype)


def class_block_bnneck_norm(x, gamma, beta, weight_prepared, class_num,
                            mode='before_bn'):
    """x: (N, D) float; gamma/beta: (D,); weight_prepared: (D, C_pad) bf16 from
    prepare_classifier_weight(); returns (N, class_num) float32 logits."""
    if mode not in _MODES:
        raise AssertionError(f"invalid mode {mode!r}")   # mirrors the assert 0
    pre_norm, use_bn, post_norm = _MODES[mode]

    n, d = x.shape
    d_w, c_pad = weight_prepared.shape
    assert d_w == d, "weight_prepared must be (D, C_pad) from prepare_classifier_weight"

    # Stage 1 (one-shot): hoisted normalize/BN pipeline -> resident bf16 activation.
    z = _bn_norm_prepass(x, gamma, beta, pre_norm, use_bn, post_norm)

    # Stage 2 tiling: largest candidate tile dividing c_pad that fits the
    # generation-aware block budget (prep padded c_pad to a tile multiple).
    block_budget, vmem_cap = _gen_budgets()
    tc = 128
    for cand in _TC_CANDIDATES:
        if c_pad % cand == 0 and _stage2_bytes(n, d, cand) <= block_budget:
            tc = cand
            break
    vmem_limit = int(min(max(4 * _stage2_bytes(n, d, tc), 16 << 20), vmem_cap))

    out = pl.pallas_call(
        _logits_kernel,
        out_shape=jax.ShapeDtypeStruct((n, c_pad), jnp.float32),
        grid_spec=pltpu.PrefetchScalarGridSpec(
            num_scalar_prefetch=0,
            grid=(c_pad // tc,),
            in_specs=[
                pl.BlockSpec((n, d), lambda j: (0, 0)),    # z resident (bf16)
                pl.BlockSpec((d, tc), lambda j: (0, j)),   # weight streamed over C
            ],
            out_specs=pl.BlockSpec((n, tc), lambda j: (0, j)),
        ),
        compiler_params=pltpu.CompilerParams(
            dimension_semantics=("parallel",),             # C tiles independent (v7x: 2 TCs)
            vmem_limit_bytes=vmem_limit),
    )(z, weight_prepared)

    # TODO(synk): for very large N*C, return the padded logits and slice downstream
    # to avoid this extra full-array HBM copy.
    return out[:, :class_num]


# ------------------------------------ reference ------------------------------------

def _reference(x, gamma, beta, weight, mode):
    def l2n(v):
        nrm = jnp.sqrt(jnp.sum(v * v, axis=-1, keepdims=True))
        return v / jnp.maximum(nrm, L2_EPS)

    def bn(v):
        mean = jnp.mean(v, axis=0, keepdims=True)
        var = jnp.mean((v - mean) ** 2, axis=0, keepdims=True)   # biased (train BN)
        return (v - mean) / jnp.sqrt(var + BN_EPS) * gamma[None, :] + beta[None, :]

    if mode == 'before_bn':
        h = bn(l2n(x))
    elif mode == 'after_bn':
        h = l2n(bn(x))
    elif mode == 'wo_bn':
        h = l2n(x)
    else:
        h = x
    return h @ l2n(weight).T


if __name__ == "__main__":
    key = jax.random.PRNGKey(0)
    k_x, k_g, k_w = jax.random.split(key, 3)

    batch, input_dim, class_num = 32, 256, 200
    mode = 'before_bn'

    x = jax.random.normal(k_x, (batch, input_dim), dtype=jnp.float32)
    # weights_init_kaiming for BatchNorm1d: weight ~ N(1, 0.02), bias = 0
    gamma = 1.0 + 0.02 * jax.random.normal(k_g, (input_dim,), dtype=jnp.float32)
    beta = jnp.zeros((input_dim,), dtype=jnp.float32)
    # weights_init_classifier: weight ~ N(0, 0.001)
    weight = 0.001 * jax.random.normal(k_w, (class_num, input_dim),
                                       dtype=jnp.float32)

    # One-time parameter prep (cache; re-run whenever the classifier weight changes).
    tc = choose_class_tile(batch, input_dim, class_num)
    weight_p = prepare_classifier_weight(weight, tc=tc)

    out = class_block_bnneck_norm(x, gamma, beta, weight_p, class_num, mode=mode)
    out = jax.block_until_ready(out)

    ref = _reference(x, gamma, beta, weight, mode)
    assert out.shape == (batch, class_num)
    max_err = float(jnp.max(jnp.abs(out - ref)))
    # bf16 MXU path vs f32 reference -> loosened tolerance.
    assert jnp.allclose(out, ref, atol=3e-2, rtol=3e-2), f"mismatch: {max_err}"

    print("KERNEL_OK")
</pallas_src>

<mosaic_0001>
module attributes {stable_mosaic.version = 11 : i64} {
  func.func @_prepass_kernel(%arg0: i32, %arg1: memref<32x256xf32, #tpu.memory_space<vmem>>, %arg2: memref<1x256xf32, #tpu.memory_space<vmem>>, %arg3: memref<1x256xf32, #tpu.memory_space<vmem>>, %arg4: memref<32x256xbf16, #tpu.memory_space<vmem>>) attributes {dimension_semantics = [#tpu.dimension_semantics<arbitrary>], iteration_bounds = array<i64: 1>, scalar_prefetch = 0 : i64, scratch_operands = 0 : i64, tpu.core_type = #tpu.core_type<tc>, window_params = [{pipeline_mode = #tpu.pipeline_mode<synchronous>, transform_indices = @transform_0, window_bounds = array<i64: 32, 256>}, {pipeline_mode = #tpu.pipeline_mode<synchronous>, transform_indices = @transform_1, window_bounds = array<i64: 1, 256>}, {pipeline_mode = #tpu.pipeline_mode<synchronous>, transform_indices = @transform_2, window_bounds = array<i64: 1, 256>}, {pipeline_mode = #tpu.pipeline_mode<synchronous>, transform_indices = @transform_3, window_bounds = array<i64: 32, 256>}]} {
    %c0 = arith.constant 0 : index
    %c0_0 = arith.constant 0 : index
    %0 = vector.load %arg1[%c0, %c0_0] : memref<32x256xf32, #tpu.memory_space<vmem>>, vector<32x256xf32>
    %1 = arith.mulf %0, %0 : vector<32x256xf32>
    %cst = arith.constant dense<0.000000e+00> : vector<32xf32>
    %2 = vector.multi_reduction <add>, %1, %cst [1] : vector<32x256xf32> to vector<32xf32>
    %3 = vector.shape_cast %2 : vector<32xf32> to vector<32x1xf32>
    %cst_1 = arith.constant 1.000000e-24 : f32
    %4 = vector.broadcast %cst_1 : f32 to vector<32x1xf32>
    %5 = arith.maximumf %3, %4 : vector<32x1xf32>
    %6 = math.rsqrt %5 : vector<32x1xf32>
    %7 = vector.broadcast %6 : vector<32x1xf32> to vector<32x256xf32>
    %8 = arith.mulf %0, %7 : vector<32x256xf32>
    %cst_2 = arith.constant dense<0.000000e+00> : vector<256xf32>
    %9 = vector.multi_reduction <add>, %8, %cst_2 [0] : vector<32x256xf32> to vector<256xf32>
    %10 = vector.shape_cast %9 : vector<256xf32> to vector<1x256xf32>
    %cst_3 = arith.constant 3.125000e-02 : f32
    %11 = vector.broadcast %cst_3 : f32 to vector<1x256xf32>
    %12 = arith.mulf %10, %11 : vector<1x256xf32>
    %13 = vector.broadcast %12 : vector<1x256xf32> to vector<32x256xf32>
    %14 = arith.subf %8, %13 : vector<32x256xf32>
    %15 = arith.mulf %14, %14 : vector<32x256xf32>
    %cst_4 = arith.constant dense<0.000000e+00> : vector<256xf32>
    %16 = vector.multi_reduction <add>, %15, %cst_4 [0] : vector<32x256xf32> to vector<256xf32>
    %17 = vector.shape_cast %16 : vector<256xf32> to vector<1x256xf32>
    %cst_5 = arith.constant 3.125000e-02 : f32
    %18 = vector.broadcast %cst_5 : f32 to vector<1x256xf32>
    %19 = arith.mulf %17, %18 : vector<1x256xf32>
    %c0_6 = arith.constant 0 : index
    %c0_7 = arith.constant 0 : index
    %20 = vector.load %arg2[%c0_6, %c0_7] : memref<1x256xf32, #tpu.memory_space<vmem>>, vector<1x256xf32>
    %cst_8 = arith.constant 9.99999974E-6 : f32
    %21 = vector.broadcast %cst_8 : f32 to vector<1x256xf32>
    %22 = arith.addf %19, %21 : vector<1x256xf32>
    %23 = math.rsqrt %22 : vector<1x256xf32>
    %24 = arith.mulf %20, %23 : vector<1x256xf32>
    %25 = vector.broadcast %24 : vector<1x256xf32> to vector<32x256xf32>
    %26 = arith.mulf %14, %25 : vector<32x256xf32>
    %c0_9 = arith.constant 0 : index
    %c0_10 = arith.constant 0 : index
    %27 = vector.load %arg3[%c0_9, %c0_10] : memref<1x256xf32, #tpu.memory_space<vmem>>, vector<1x256xf32>
    %28 = vector.broadcast %27 : vector<1x256xf32> to vector<32x256xf32>
    %29 = arith.addf %26, %28 : vector<32x256xf32>
    %30 = arith.truncf %29 : vector<32x256xf32> to vector<32x256xbf16>
    %c0_11 = arith.constant 0 : index
    %c0_12 = arith.constant 0 : index
    %31 = vector.load %arg4[%c0_11, %c0_12] : memref<32x256xbf16, #tpu.memory_space<vmem>>, vector<32x256xbf16>
    tpu.vector_store %arg4[%c0_11, %c0_12], %30 {strides = array<i32>} : memref<32x256xbf16, #tpu.memory_space<vmem>>, vector<32x256xbf16>,
    return
  }
  func.func @transform_0(%arg0: i32) -> (i32, i32) {
    %c0_i32 = arith.constant 0 : i32
    %c0_i32_0 = arith.constant 0 : i32
    %c0_i32_1 = arith.constant 0 : i32
    return %c0_i32, %c0_i32_0 : i32, i32
  }
  func.func @transform_1(%arg0: i32) -> (i32, i32) {
    %c0_i32 = arith.constant 0 : i32
    %c0_i32_0 = arith.constant 0 : i32
    %c0_i32_1 = arith.constant 0 : i32
    return %c0_i32, %c0_i32_0 : i32, i32
  }
  func.func @transform_2(%arg0: i32) -> (i32, i32) {
    %c0_i32 = arith.constant 0 : i32
    %c0_i32_0 = arith.constant 0 : i32
    %c0_i32_1 = arith.constant 0 : i32
    return %c0_i32, %c0_i32_0 : i32, i32
  }
  func.func @transform_3(%arg0: i32) -> (i32, i32) {
    %c0_i32 = arith.constant 0 : i32
    %c0_i32_0 = arith.constant 0 : i32
    %c0_i32_1 = arith.constant 0 : i32
    return %c0_i32, %c0_i32_0 : i32, i32
  }
}

</mosaic_0001>

<llo_original>
// kernel: tpu_custom_call.1
$region0: #{tpu_custom_call.1}
  #allocation0 [shape = 'u32[]', space=smem, size = 0x4, offset = 0x4, fixed_abs, tag = 'smem constant byte address 0x4 - core index']
  #allocation1 [shape = 'u32[144,128]{1,0:T(1,128)}', space=vmem, size = 0x12000, scoped, tag = 'internal scratch']
  %s0 = inlined_call_operand.hbm [shape: f32[32,256], index: 0, kind: input, shape index: {}]
  %s1 = inlined_call_operand.hbm [shape: f32[1,256], index: 1, kind: input, shape index: {}]
  %s2 = inlined_call_operand.vmem [shape: f32[1,256], index: 2, kind: input, shape index: {}]
  %s3 = inlined_call_operand.hbm [shape: bf16[32,256], index: 3, kind: output, shape index: {}]
  %s4 = sld [smem:[#allocation0]]
  $region30: #{tpu_custom_call.1} parent=0
    _
  %s6 = ssub.s32 1, %s4
  %s7 = scalar_select 0, %s6, %s4
  $region1: #{tpu_custom_call.1} parent=0
    #allocation2 [shape = 'u8[32768]{0}', space=vmem, size = 0x8000, scoped, tag = 'input window, operand 0, single buffered']
    #allocation3 [shape = 's32[1]{0}', space=sflag, size = 0x4, scoped, tag = 'scoped memory for tpu_custom_call.1']
    #allocation4 [shape = 's32[1]{0}', space=sflag, size = 0x4, scoped, tag = 'scoped memory for tpu_custom_call.1']
    #allocation5 [shape = 'u8[1024]{0}', space=vmem, size = 0x400, scoped, tag = 'input window, operand 1, single buffered']
    #allocation6 [shape = 's32[1]{0}', space=sflag, size = 0x4, scoped, tag = 'scoped memory for tpu_custom_call.1']
    #allocation7 [shape = 'u8[16384]{0}', space=vmem, size = 0x4000, scoped, tag = 'output window, operand 0, single buffered']
    %8 = vsyncpa [#allocation3], 0
    %9 = vsyncpa [#allocation6], 0
    %10 = vsyncpa [#allocation4], 0
    // Predicated region
    $region2: #{tpu_custom_call.1} parent=1 // pred_check
      _
    $region3: #{tpu_custom_call.1} parent=1 // pred_check_branch
      %12 = sbr.rel (0) target = $region5
    $region4: #{tpu_custom_call.1} parent=1 // pred_region
      %s14 = ssub.s32 1024, 1024
      %15 = vsyncadd [#allocation3], %s14
      %s16 = sshll.u32 [#allocation2], 4
      %s17 = int_to_ptr.vmem [resolvable:$true] %s16
      %22 = dma.hbm_to_vmem [thread:$0]  %s0, 1024, %s17, [#allocation3], 256, 256, 16
    $region5: #{tpu_custom_call.1} parent=1 // pred_fallthru
      _
    // Predicated region
    $region6: #{tpu_custom_call.1} parent=1 // pred_check
      _
    $region7: #{tpu_custom_call.1} parent=1 // pred_check_branch
      %24 = sbr.rel (0) target = $region9
    $region8: #{tpu_custom_call.1} parent=1 // pred_region
      %s26 = ssub.s32 32, 32
      %27 = vsyncadd [#allocation6], %s26
      %s29 = sshll.u32 [#allocation5], 4
      %s30 = int_to_ptr.vmem [resolvable:$true] %s29
      %32 = dma.hbm_to_vmem [thread:$0]  %s1, 32, %s30, [#allocation6]
    $region9: #{tpu_custom_call.1} parent=1 // pred_fallthru
      _
    // Predicated region
    $region10: #{tpu_custom_call.1} parent=1 // pred_check
      _
    $region11: #{tpu_custom_call.1} parent=1 // pred_check_branch
      %34 = sbr.rel (0) target = $region13
    $region12: #{tpu_custom_call.1} parent=1 // pred_region
      _
    $region13: #{tpu_custom_call.1} parent=1 // pred_fallthru
      _
    // Predicated region
    $region14: #{tpu_custom_call.1} parent=1 // pred_check
      _
    $region15: #{tpu_custom_call.1} parent=1 // pred_check_branch
      %36 = sbr.rel (0) target = $region17
    $region16: #{tpu_custom_call.1} parent=1 // pred_region
      %37 = dma.done [#allocation3], 1024
    $region17: #{tpu_custom_call.1} parent=1 // pred_fallthru
      _
    // Predicated region
    $region18: #{tpu_custom_call.1} parent=1 // pred_check
      _
    $region19: #{tpu_custom_call.1} parent=1 // pred_check_branch
      %39 = sbr.rel (0) target = $region21
    $region20: #{tpu_custom_call.1} parent=1 // pred_region
      %40 = dma.done [#allocation6], 32
    $region21: #{tpu_custom_call.1} parent=1 // pred_fallthru
      _
    %v41 = vld [vmem:[#allocation2] sm:$0xff]
    %v42 = vld [vmem:[#allocation2 + $0x8] sm:$0xff]
    %v43 = vld [vmem:[#allocation2 + $0x10] sm:$0xff]
    %v44 = vld [vmem:[#allocation2 + $0x18] sm:$0xff]
    %v45 = vld [vmem:[#allocation2 + $0x20] sm:$0xff]
    %v46 = vld [vmem:[#allocation2 + $0x28] sm:$0xff]
    %v47 = vld [vmem:[#allocation2 + $0x30] sm:$0xff]
    %v48 = vld [vmem:[#allocation2 + $0x38] sm:$0xff]
    %v49 = vmul.f32 %v41, %v41
    %v50 = vmul.f32 %v42, %v42
    %v51 = vmul.f32 %v43, %v43
    %v52 = vmul.f32 %v44, %v44
    %v53 = vmul.f32 %v45, %v45
    %v54 = vmul.f32 %v46, %v46
    %v55 = vmul.f32 %v47, %v47
    %v56 = vmul.f32 %v48, %v48
    %v57 = vadd.f32 %v49, %v50
    %58 = vadd.xlane.f32.xlu0 %v57
    %v59 = vpop.xlane.xlu0 %58
    %v60 = vadd.f32 %v51, %v52
    %61 = vadd.xlane.f32.xlu0 %v60
    %v62 = vpop.xlane.xlu0 %61
    %v63 = vadd.f32 %v53, %v54
    %64 = vadd.xlane.f32.xlu0 %v63
    %v65 = vpop.xlane.xlu0 %64
    %v66 = vadd.f32 %v55, %v56
    %67 = vadd.xlane.f32.xlu0 %v66
    %v68 = vpop.xlane.xlu0 %67
    %v69 = vmax.f32 %v59, 1e-24
    %v70 = vmax.f32 %v62, 1e-24
    %v71 = vmax.f32 %v65, 1e-24
    %v72 = vmax.f32 %v68, 1e-24
    %v73 = vrsqrt.pop %v69
    %v74 = vrsqrt.pop %v70
    %v75 = vrsqrt.pop %v71
    %v76 = vrsqrt.pop %v72
    %v77 = vmul.f32 %v41, %v73
    %v78 = vmul.f32 %v42, %v73
    %v79 = vmul.f32 %v43, %v74
    %v80 = vmul.f32 %v44, %v74
    %v81 = vmul.f32 %v45, %v75
    %v82 = vmul.f32 %v46, %v75
    %v83 = vmul.f32 %v47, %v76
    %v84 = vmul.f32 %v48, %v76
    %v85 = vadd.f32 %v77, %v79
    %v86 = vadd.f32 %v85, %v81
    %v87 = vadd.f32 %v86, %v83
    %v88 = vrot.slane %v87, 4
    %v89 = vadd.f32 %v87, %v88
    %v90 = vrot.slane %v89, 2
    %v91 = vadd.f32 %v89, %v90
    %v92 = vrot.slane %v91, 1
    %v93 = vadd.f32 %v91, %v92
    %v94 = vadd.f32 %v78, %v80
    %v95 = vadd.f32 %v94, %v82
    %v96 = vadd.f32 %v95, %v84
    %v97 = vrot.slane %v96, 4
    %v98 = vadd.f32 %v96, %v97
    %v99 = vrot.slane %v98, 2
    %v100 = vadd.f32 %v98, %v99
    %v101 = vrot.slane %v100, 1
    %v102 = vadd.f32 %v100, %v101
    %v103 = vmul.f32 %v93, 0.03125
    %v104 = vmul.f32 %v102, 0.03125
    %v105 = vsub.f32 %v77, %v103
    %v106 = vsub.f32 %v78, %v104
    %v107 = vsub.f32 %v79, %v103
    %v108 = vsub.f32 %v80, %v104
    %v109 = vsub.f32 %v81, %v103
    %v110 = vsub.f32 %v82, %v104
    %v111 = vsub.f32 %v83, %v103
    %v112 = vsub.f32 %v84, %v104
    %v113 = vmul.f32 %v105, %v105
    %v114 = vmul.f32 %v106, %v106
    %v115 = vmul.f32 %v107, %v107
    %v116 = vmul.f32 %v108, %v108
    %v117 = vmul.f32 %v109, %v109
    %v118 = vmul.f32 %v110, %v110
    %v119 = vmul.f32 %v111, %v111
    %v120 = vmul.f32 %v112, %v112
    %v121 = vadd.f32 %v113, %v115
    %v122 = vadd.f32 %v121, %v117
    %v123 = vadd.f32 %v122, %v119
    %v124 = vrot.slane %v123, 4
    %v125 = vadd.f32 %v123, %v124
    %v126 = vrot.slane %v125, 2
    %v127 = vadd.f32 %v125, %v126
    %v128 = vrot.slane %v127, 1
    %v129 = vadd.f32 %v127, %v128
    %v130 = vadd.f32 %v114, %v116
    %v131 = vadd.f32 %v130, %v118
    %v132 = vadd.f32 %v131, %v120
    %v133 = vrot.slane %v132, 4
    %v134 = vadd.f32 %v132, %v133
    %v135 = vrot.slane %v134, 2
    %v136 = vadd.f32 %v134, %v135
    %v137 = vrot.slane %v136, 1
    %v138 = vadd.f32 %v136, %v137
    %v139 = vmul.f32 %v129, 0.03125
    %v140 = vmul.f32 %v138, 0.03125
    %v141 = vld [vmem:[#allocation5] sm:$0x3]
    %v142 = vadd.f32 %v139, 1e-05
    %v143 = vadd.f32 %v140, 1e-05
    %v144 = vrsqrt.pop %v142
    %v145 = vrsqrt.pop %v143
    %v148 = vcombine.low %v144, %v145
    %v150 = vunpack.c.l.s4 1966171168
    %v151 = vunpack.c.0.s8 %v150
    %v152 = vlaneseq
    %v153 = vshrl.u32 %v152, 7
    %v154 = vsub.s32 %v151, %v153
    %v155 = vrot.slane %v148, %v154
    %v157 = vunpack.c.l.s4 1966171168
    %v158 = vunpack.c.0.s8 %v157
    %v159 = vlaneseq
    %v160 = vshrl.u32 %v159, 7
    %v161 = vsub.s32 %v158, %v160
    %v162 = vrot.slane %v155, %v161
    %v164 = vmul.f32 %v141, %v162
    %v166 = vlaneseq
    %v167 = vshrl.u32 %v166, 7
    %v168 = vsub.s32 0, %v167
    %v169 = vrot.slane %v164, %v168
    %v170 = vlaneseq
    %v171 = vshrl.u32 %v170, 7
    %v172 = vsub.s32 1, %v171
    %v173 = vrot.slane %v164, %v172
    %v176 = vmul.f32 %v105, %v169
    %v177 = vmul.f32 %v106, %v173
    %v178 = vmul.f32 %v107, %v169
    %v179 = vmul.f32 %v108, %v173
    %v180 = vmul.f32 %v109, %v169
    %v181 = vmul.f32 %v110, %v173
    %v182 = vmul.f32 %v111, %v169
    %v183 = vmul.f32 %v112, %v173
    %v184 = vld [vmem:[%s2] sm:$0x3]
    %v186 = vlaneseq
    %v187 = vshrl.u32 %v186, 7
    %v188 = vsub.s32 0, %v187
    %v189 = vrot.slane %v184, %v188
    %v190 = vlaneseq
    %v191 = vshrl.u32 %v190, 7
    %v192 = vsub.s32 1, %v191
    %v193 = vrot.slane %v184, %v192
    %v196 = vadd.f32 %v176, %v189
    %v197 = vadd.f32 %v177, %v193
    %v198 = vadd.f32 %v178, %v189
    %v199 = vadd.f32 %v179, %v193
    %v200 = vadd.f32 %v180, %v189
    %v201 = vadd.f32 %v181, %v193
    %v202 = vadd.f32 %v182, %v189
    %v203 = vadd.f32 %v183, %v193
    %v204 = vpack.c.bf16 %v198, %v196
    %v205 = vpack.c.bf16 %v199, %v197
    %v206 = vpack.c.bf16 %v202, %v200
    %v207 = vpack.c.bf16 %v203, %v201
    %v212 = vunpack.c.l.b16 %v204
    %v213 = vunpack.c.l.b16 %v205
    %v214 = vunpack.c.h.b16 %v204
    %v215 = vunpack.c.h.b16 %v205
    %v216 = vunpack.c.l.b16 %v206
    %v217 = vunpack.c.l.b16 %v207
    %v218 = vunpack.c.h.b16 %v206
    %v219 = vunpack.c.h.b16 %v207
    %v220 = vpack.c.b16 %v213, %v212
    %v221 = vpack.c.b16 %v215, %v214
    %v222 = vpack.c.b16 %v217, %v216
    %v223 = vpack.c.b16 %v219, %v218
    %228 = vst [vmem:[#allocation7] sm:$0xff] %v220
    %229 = vst [vmem:[#allocation7 + $0x8] sm:$0xff] %v221
    %230 = vst [vmem:[#allocation7 + $0x10] sm:$0xff] %v222
    %231 = vst [vmem:[#allocation7 + $0x18] sm:$0xff] %v223
    // Predicated region
    $region22: #{tpu_custom_call.1} parent=1 // pred_check
      _
    $region23: #{tpu_custom_call.1} parent=1 // pred_check_branch
      %233 = sbr.rel (0) target = $region25
    $region24: #{tpu_custom_call.1} parent=1 // pred_region
      %s235 = ssub.s32 512, 512
      %236 = vsyncadd [#allocation4], %s235
      %s237 = sshll.u32 [#allocation7], 4
      %s238 = int_to_ptr.vmem [resolvable:$true] %s237
      %243 = dma.vmem_to_hbm [thread:$0]  %s238, 512, %s3, [#allocation4], 128, 128, 8
    $region25: #{tpu_custom_call.1} parent=1 // pred_fallthru
      _
    // Predicated region
    $region26: #{tpu_custom_call.1} parent=1 // pred_check
      _
    $region27: #{tpu_custom_call.1} parent=1 // pred_check_branch
      %245 = sbr.rel (0) target = $region29
    $region28: #{tpu_custom_call.1} parent=1 // pred_region
      %246 = dma.done [#allocation4], 512
    $region29: #{tpu_custom_call.1} parent=1 // pred_fallthru
      _
    %247 = vsyncpa [#allocation3], 1
    %248 = vsyncpa [#allocation6], 1
    %249 = vsyncpa [#allocation4], 1

</llo_original>
